<compile_context>
chip_gen: v7x
topology: tpu7x:2x2x1
jax: 0.10.0
libtpu: 0.0.40
codegen_flags: <defaults>
</compile_context>

<pallas_src>
import jax
import jax.numpy as jnp
from jax.experimental import pallas as pl
from jax.experimental.pallas import tpu as pltpu


def _additive_kernel(xt_ref, xdist_ref, xfeat_ref, add_ref, mask_ref,
                     wslab_ref, w1_ref, out_ref):
    L = xt_ref.shape[0]
    F = xfeat_ref.shape[1]
    Np = out_ref.shape[1]

    # ---- fc1: out1[b, n] = sum_l x[b, l, n] * w1[l]  (b1 folded into add) ----
    acc = xt_ref[0] * w1_ref[0]
    for l in range(1, L):                    # L small & static -> unrolled FMAs
        acc = acc + xt_ref[l] * w1_ref[l]

    # ---- fc2: dist chunk + out chunk via MXU against the fused weight slab ----
    dist_b = jnp.broadcast_to(xdist_ref[...], acc.shape)        # x_dist.expand
    zd = jnp.dot(dist_b, wslab_ref[0:Np, :],
                 preferred_element_type=jnp.float32)            # (B, N)
    zo = jnp.dot(acc, wslab_ref[Np:2 * Np, :],
                 preferred_element_type=jnp.float32)            # (B, N)
    z = zo + zd + add_ref[...]      # add = emb@W2e[x_week] + b2 + b1-fold
                                    # (padded lanes carry -1e30 here)

    # ---- features chunk (F=2) on the VPU: two broadcast FMAs ----
    xf = xfeat_ref[...]                                         # (B, F)
    for fi in range(F):
        z = z + xf[:, fi:fi + 1] * wslab_ref[2 * Np + fi:2 * Np + fi + 1, :]

    # ---- softmax(dim=1) -> masked_fill(mask, 0) -> L1 normalize ----
    m = jnp.max(z, axis=1, keepdims=True)
    e = jnp.exp(z - m)                       # padded lanes -> exp(-1e30) = 0
    p = e / jnp.sum(e, axis=1, keepdims=True)
    pm = jnp.where(mask_ref[...] != 0.0, 0.0, p)
    denom = jnp.maximum(jnp.sum(pm, axis=1, keepdims=True), 1e-12)
    out_ref[...] = pm / denom


def additive_fullpred3(x, x_dist, x_features, x_week, x_mask, params):
    B, L, N = x.shape
    F = x_features.shape[1]
    Bp = ((B + 7) // 8) * 8
    Np = ((N + 127) // 128) * 128

    w2 = params["w2"]                        # (N, 2N+E+F) torch fc2.weight
    b2, w1, b1, emb = params["b2"], params["w1"], params["b1"], params["emb"]
    E = emb.shape[1]

    # fc2 weight split by input chunk: [x_dist | out1 | emb | features]
    W2d = w2[:, :N].T                        # (N, N)
    W2o = w2[:, N:2 * N].T                   # (N, N)
    W2e = w2[:, 2 * N:2 * N + E].T           # (E, N)
    W2f = w2[:, 2 * N + E:].T                # (F, N)

    # Single fused VMEM weight slab: rows [0:Np)=W2d, [Np:2Np)=W2o, [2Np:2Np+F)=W2f
    wslab = jnp.zeros((2 * Np + F, Np), jnp.float32)
    wslab = wslab.at[:N, :N].set(W2d)
    wslab = wslab.at[Np:Np + N, :N].set(W2o)
    wslab = wslab.at[2 * Np:2 * Np + F, :N].set(W2f)

    # Constant-folded additive term: embedding path + fc2 bias + fc1 bias
    # pushed through W2o.  Padded lanes get -1e30 so softmax ignores them.
    T = emb @ W2e                                            # (nweekdays, N)
    add_true = T[x_week] + b2[None, :] + b1[0] * jnp.sum(W2o, axis=0)[None, :]
    add = jnp.full((Bp, Np), -1e30, jnp.float32).at[:B, :N].set(
        add_true.astype(jnp.float32))

    # Pad activations to (8, 128)-friendly shapes; x goes in as (L, B, N).
    xt = jnp.zeros((L, Bp, Np), jnp.float32).at[:, :B, :N].set(
        jnp.transpose(x.astype(jnp.float32), (1, 0, 2)))
    xd = jnp.zeros((1, Np), jnp.float32).at[0, :N].set(x_dist.astype(jnp.float32))
    xf = jnp.zeros((Bp, F), jnp.float32).at[:B, :].set(x_features.astype(jnp.float32))
    mk = jnp.ones((Bp, Np), jnp.float32).at[:B, :N].set(x_mask.astype(jnp.float32))

    vmem = pl.BlockSpec(memory_space=pltpu.MemorySpace.VMEM)
    smem = pl.BlockSpec(memory_space=pltpu.MemorySpace.SMEM)

    out = pl.pallas_call(
        _additive_kernel,
        out_shape=jax.ShapeDtypeStruct((Bp, Np), jnp.float32),
        in_specs=[vmem, vmem, vmem, vmem, vmem, vmem, smem],
        out_specs=vmem,
    )(xt, xd, xf, add, mk, wslab, w1.astype(jnp.float32))
    return out[:B, :N]


def ref_forward(x, x_dist, x_features, x_week, x_mask, p):
    """Pure-JAX reference mirroring the PyTorch forward (default config)."""
    B = x.shape[0]
    out1 = jnp.einsum("bln,l->bn", x, p["w1"]) + p["b1"][0]
    emb = p["emb"][x_week]
    cat = jnp.concatenate(
        [jnp.broadcast_to(x_dist[None, :], (B, x_dist.shape[0])),
         out1, emb, x_features], axis=1)
    z = cat @ p["w2"].T + p["b2"][None, :]
    sm = jax.nn.softmax(z, axis=1)
    smm = jnp.where(x_mask != 0, 0.0, sm)
    denom = jnp.maximum(jnp.sum(jnp.abs(smm), axis=1, keepdims=True), 1e-12)
    return smm / denom


def make_params(key, *, embedding_size, lookback_period, nnodes, n_features,
                nweekdays):
    ks = jax.random.split(key, 5)
    s = 0.1
    in2 = 2 * nnodes + embedding_size + n_features
    return {
        "emb": s * jax.random.normal(ks[0], (nweekdays, embedding_size), jnp.float32),
        "w1": s * jax.random.normal(ks[1], (lookback_period,), jnp.float32),
        "b1": s * jax.random.normal(ks[2], (1,), jnp.float32),
        "w2": s * jax.random.normal(ks[3], (nnodes, in2), jnp.float32),
        "b2": s * jax.random.normal(ks[4], (nnodes,), jnp.float32),
    }


if __name__ == "__main__":
    B = 2                 # n_rows
    L = 8                 # lookback_period
    N = 74                # nnodes (module default)
    F = 2                 # n_features
    E = 4                 # embedding_size
    W = 7                 # nweekdays

    key = jax.random.PRNGKey(0)
    kp, kx, kd, kf, kw, kmask = jax.random.split(key, 6)

    params = make_params(kp, embedding_size=E, lookback_period=L, nnodes=N,
                         n_features=F, nweekdays=W)

    x = jax.random.normal(kx, (B, L, N), jnp.float32)
    x_dist = jax.random.normal(kd, (N,), jnp.float32)
    x_features = jax.random.normal(kf, (B, F), jnp.float32)
    x_week = jax.random.randint(kw, (B,), 0, W, jnp.int32)
    x_mask = (jax.random.uniform(kmask, (B, N)) < 0.1).astype(jnp.int32)

    out = additive_fullpred3(x, x_dist, x_features, x_week, x_mask, params)
    out = jax.block_until_ready(out)

    ref = ref_forward(x, x_dist, x_features, x_week, x_mask, params)
    assert out.shape == (B, N)
    assert jnp.allclose(out, ref, atol=1e-4, rtol=1e-4)

    print("KERNEL_OK")
</pallas_src>

<mosaic_0001>
module attributes {stable_mosaic.version = 11 : i64} {
  func.func @_additive_kernel(%arg0: memref<8x8x128xf32, #tpu.memory_space<vmem>>, %arg1: memref<1x128xf32, #tpu.memory_space<vmem>>, %arg2: memref<8x2xf32, #tpu.memory_space<vmem>>, %arg3: memref<8x128xf32, #tpu.memory_space<vmem>>, %arg4: memref<8x128xf32, #tpu.memory_space<vmem>>, %arg5: memref<258x128xf32, #tpu.memory_space<vmem>>, %arg6: memref<8xf32, #tpu.memory_space<smem>>, %arg7: memref<8x128xf32, #tpu.memory_space<vmem>>) attributes {dimension_semantics = [], scalar_prefetch = 0 : i64, scratch_operands = 0 : i64, tpu.core_type = #tpu.core_type<tc>} {
    %c0 = arith.constant 0 : index
    %c0_0 = arith.constant 0 : index
    %c0_1 = arith.constant 0 : index
    %0 = vector.load %arg0[%c0, %c0_0, %c0_1] : memref<8x8x128xf32, #tpu.memory_space<vmem>>, vector<1x8x128xf32>
    %1 = vector.shape_cast %0 : vector<1x8x128xf32> to vector<8x128xf32>
    %c0_2 = arith.constant 0 : index
    %2 = memref.load %arg6[%c0_2] : memref<8xf32, #tpu.memory_space<smem>>
    %3 = vector.broadcast %2 : f32 to vector<8x128xf32>
    %4 = arith.mulf %1, %3 : vector<8x128xf32>
    %c1 = arith.constant 1 : index
    %c0_3 = arith.constant 0 : index
    %c0_4 = arith.constant 0 : index
    %5 = vector.load %arg0[%c1, %c0_3, %c0_4] : memref<8x8x128xf32, #tpu.memory_space<vmem>>, vector<1x8x128xf32>
    %6 = vector.shape_cast %5 : vector<1x8x128xf32> to vector<8x128xf32>
    %c1_5 = arith.constant 1 : index
    %7 = memref.load %arg6[%c1_5] : memref<8xf32, #tpu.memory_space<smem>>
    %8 = vector.broadcast %7 : f32 to vector<8x128xf32>
    %9 = arith.mulf %6, %8 : vector<8x128xf32>
    %10 = arith.addf %4, %9 : vector<8x128xf32>
    %c2 = arith.constant 2 : index
    %c0_6 = arith.constant 0 : index
    %c0_7 = arith.constant 0 : index
    %11 = vector.load %arg0[%c2, %c0_6, %c0_7] : memref<8x8x128xf32, #tpu.memory_space<vmem>>, vector<1x8x128xf32>
    %12 = vector.shape_cast %11 : vector<1x8x128xf32> to vector<8x128xf32>
    %c2_8 = arith.constant 2 : index
    %13 = memref.load %arg6[%c2_8] : memref<8xf32, #tpu.memory_space<smem>>
    %14 = vector.broadcast %13 : f32 to vector<8x128xf32>
    %15 = arith.mulf %12, %14 : vector<8x128xf32>
    %16 = arith.addf %10, %15 : vector<8x128xf32>
    %c3 = arith.constant 3 : index
    %c0_9 = arith.constant 0 : index
    %c0_10 = arith.constant 0 : index
    %17 = vector.load %arg0[%c3, %c0_9, %c0_10] : memref<8x8x128xf32, #tpu.memory_space<vmem>>, vector<1x8x128xf32>
    %18 = vector.shape_cast %17 : vector<1x8x128xf32> to vector<8x128xf32>
    %c3_11 = arith.constant 3 : index
    %19 = memref.load %arg6[%c3_11] : memref<8xf32, #tpu.memory_space<smem>>
    %20 = vector.broadcast %19 : f32 to vector<8x128xf32>
    %21 = arith.mulf %18, %20 : vector<8x128xf32>
    %22 = arith.addf %16, %21 : vector<8x128xf32>
    %c4 = arith.constant 4 : index
    %c0_12 = arith.constant 0 : index
    %c0_13 = arith.constant 0 : index
    %23 = vector.load %arg0[%c4, %c0_12, %c0_13] : memref<8x8x128xf32, #tpu.memory_space<vmem>>, vector<1x8x128xf32>
    %24 = vector.shape_cast %23 : vector<1x8x128xf32> to vector<8x128xf32>
    %c4_14 = arith.constant 4 : index
    %25 = memref.load %arg6[%c4_14] : memref<8xf32, #tpu.memory_space<smem>>
    %26 = vector.broadcast %25 : f32 to vector<8x128xf32>
    %27 = arith.mulf %24, %26 : vector<8x128xf32>
    %28 = arith.addf %22, %27 : vector<8x128xf32>
    %c5 = arith.constant 5 : index
    %c0_15 = arith.constant 0 : index
    %c0_16 = arith.constant 0 : index
    %29 = vector.load %arg0[%c5, %c0_15, %c0_16] : memref<8x8x128xf32, #tpu.memory_space<vmem>>, vector<1x8x128xf32>
    %30 = vector.shape_cast %29 : vector<1x8x128xf32> to vector<8x128xf32>
    %c5_17 = arith.constant 5 : index
    %31 = memref.load %arg6[%c5_17] : memref<8xf32, #tpu.memory_space<smem>>
    %32 = vector.broadcast %31 : f32 to vector<8x128xf32>
    %33 = arith.mulf %30, %32 : vector<8x128xf32>
    %34 = arith.addf %28, %33 : vector<8x128xf32>
    %c6 = arith.constant 6 : index
    %c0_18 = arith.constant 0 : index
    %c0_19 = arith.constant 0 : index
    %35 = vector.load %arg0[%c6, %c0_18, %c0_19] : memref<8x8x128xf32, #tpu.memory_space<vmem>>, vector<1x8x128xf32>
    %36 = vector.shape_cast %35 : vector<1x8x128xf32> to vector<8x128xf32>
    %c6_20 = arith.constant 6 : index
    %37 = memref.load %arg6[%c6_20] : memref<8xf32, #tpu.memory_space<smem>>
    %38 = vector.broadcast %37 : f32 to vector<8x128xf32>
    %39 = arith.mulf %36, %38 : vector<8x128xf32>
    %40 = arith.addf %34, %39 : vector<8x128xf32>
    %c7 = arith.constant 7 : index
    %c0_21 = arith.constant 0 : index
    %c0_22 = arith.constant 0 : index
    %41 = vector.load %arg0[%c7, %c0_21, %c0_22] : memref<8x8x128xf32, #tpu.memory_space<vmem>>, vector<1x8x128xf32>
    %42 = vector.shape_cast %41 : vector<1x8x128xf32> to vector<8x128xf32>
    %c7_23 = arith.constant 7 : index
    %43 = memref.load %arg6[%c7_23] : memref<8xf32, #tpu.memory_space<smem>>
    %44 = vector.broadcast %43 : f32 to vector<8x128xf32>
    %45 = arith.mulf %42, %44 : vector<8x128xf32>
    %46 = arith.addf %40, %45 : vector<8x128xf32>
    %c0_24 = arith.constant 0 : index
    %c0_25 = arith.constant 0 : index
    %47 = vector.load %arg1[%c0_24, %c0_25] : memref<1x128xf32, #tpu.memory_space<vmem>>, vector<1x128xf32>
    %48 = vector.shape_cast %47 : vector<1x128xf32> to vector<1x128xf32>
    %49 = vector.broadcast %48 : vector<1x128xf32> to vector<8x128xf32>
    %c0_26 = arith.constant 0 : index
    %c0_27 = arith.constant 0 : index
    %50 = vector.load %arg5[%c0_26, %c0_27] : memref<258x128xf32, #tpu.memory_space<vmem>>, vector<128x128xf32>
    %cst = arith.constant dense<0.000000e+00> : vector<8x128xf32>
    %51 = tpu.matmul %49, %50, %cst {dimension_numbers = #tpu.dot_dimension_numbers<[1], [0], [0], [1], [0, 0, 1, 1], [], []>} : vector<8x128xf32>, vector<128x128xf32>, vector<8x128xf32> -> vector<8x128xf32>
    %c128 = arith.constant 128 : index
    %c0_28 = arith.constant 0 : index
    %52 = vector.load %arg5[%c128, %c0_28] : memref<258x128xf32, #tpu.memory_space<vmem>>, vector<128x128xf32>
    %cst_29 = arith.constant dense<0.000000e+00> : vector<8x128xf32>
    %53 = tpu.matmul %46, %52, %cst_29 {dimension_numbers = #tpu.dot_dimension_numbers<[1], [0], [0], [1], [0, 0, 1, 1], [], []>} : vector<8x128xf32>, vector<128x128xf32>, vector<8x128xf32> -> vector<8x128xf32>
    %54 = arith.addf %53, %51 : vector<8x128xf32>
    %c0_30 = arith.constant 0 : index
    %c0_31 = arith.constant 0 : index
    %55 = vector.load %arg3[%c0_30, %c0_31] : memref<8x128xf32, #tpu.memory_space<vmem>>, vector<8x128xf32>
    %56 = arith.addf %54, %55 : vector<8x128xf32>
    %c0_32 = arith.constant 0 : index
    %c0_33 = arith.constant 0 : index
    %57 = vector.load %arg2[%c0_32, %c0_33] : memref<8x2xf32, #tpu.memory_space<vmem>>, vector<8x2xf32>
    %58 = vector.extract_strided_slice %57 {offsets = [0, 0], sizes = [8, 1], strides = [1, 1]} : vector<8x2xf32> to vector<8x1xf32>
    %c256 = arith.constant 256 : index
    %c0_34 = arith.constant 0 : index
    %59 = vector.load %arg5[%c256, %c0_34] : memref<258x128xf32, #tpu.memory_space<vmem>>, vector<1x128xf32>
    %60 = vector.broadcast %58 : vector<8x1xf32> to vector<8x128xf32>
    %61 = vector.broadcast %59 : vector<1x128xf32> to vector<8x128xf32>
    %62 = arith.mulf %60, %61 : vector<8x128xf32>
    %63 = arith.addf %56, %62 : vector<8x128xf32>
    %64 = vector.extract_strided_slice %57 {offsets = [0, 1], sizes = [8, 1], strides = [1, 1]} : vector<8x2xf32> to vector<8x1xf32>
    %c257 = arith.constant 257 : index
    %c0_35 = arith.constant 0 : index
    %65 = vector.load %arg5[%c257, %c0_35] : memref<258x128xf32, #tpu.memory_space<vmem>>, vector<1x128xf32>
    %66 = vector.broadcast %64 : vector<8x1xf32> to vector<8x128xf32>
    %67 = vector.broadcast %65 : vector<1x128xf32> to vector<8x128xf32>
    %68 = arith.mulf %66, %67 : vector<8x128xf32>
    %69 = arith.addf %63, %68 : vector<8x128xf32>
    %cst_36 = arith.constant dense<0xFF800000> : vector<8xf32>
    %70 = vector.multi_reduction <maximumf>, %69, %cst_36 [1] : vector<8x128xf32> to vector<8xf32>
    %71 = vector.shape_cast %70 : vector<8xf32> to vector<8x1xf32>
    %72 = vector.broadcast %71 : vector<8x1xf32> to vector<8x128xf32>
    %73 = arith.subf %69, %72 : vector<8x128xf32>
    %74 = math.exp %73 : vector<8x128xf32>
    %cst_37 = arith.constant dense<0.000000e+00> : vector<8xf32>
    %75 = vector.multi_reduction <add>, %74, %cst_37 [1] : vector<8x128xf32> to vector<8xf32>
    %76 = vector.shape_cast %75 : vector<8xf32> to vector<8x1xf32>
    %77 = vector.broadcast %76 : vector<8x1xf32> to vector<8x128xf32>
    %78 = arith.divf %74, %77 : vector<8x128xf32>
    %c0_38 = arith.constant 0 : index
    %c0_39 = arith.constant 0 : index
    %79 = vector.load %arg4[%c0_38, %c0_39] : memref<8x128xf32, #tpu.memory_space<vmem>>, vector<8x128xf32>
    %cst_40 = arith.constant 0.000000e+00 : f32
    %80 = vector.broadcast %cst_40 : f32 to vector<8x128xf32>
    %81 = arith.cmpf one, %79, %80 : vector<8x128xf32>
    %cst_41 = arith.constant 0.000000e+00 : f32
    %82 = vector.broadcast %cst_41 : f32 to vector<8x128xf32>
    %83 = arith.select %81, %82, %78 : vector<8x128xi1>, vector<8x128xf32>
    %cst_42 = arith.constant dense<0.000000e+00> : vector<8xf32>
    %84 = vector.multi_reduction <add>, %83, %cst_42 [1] : vector<8x128xf32> to vector<8xf32>
    %85 = vector.shape_cast %84 : vector<8xf32> to vector<8x1xf32>
    %cst_43 = arith.constant 9.99999996E-13 : f32
    %86 = vector.broadcast %cst_43 : f32 to vector<8x1xf32>
    %87 = arith.maximumf %85, %86 : vector<8x1xf32>
    %88 = vector.broadcast %87 : vector<8x1xf32> to vector<8x128xf32>
    %89 = arith.divf %83, %88 : vector<8x128xf32>
    %c0_44 = arith.constant 0 : index
    %c0_45 = arith.constant 0 : index
    %90 = vector.load %arg7[%c0_44, %c0_45] : memref<8x128xf32, #tpu.memory_space<vmem>>, vector<8x128xf32>
    tpu.vector_store %arg7[%c0_44, %c0_45], %89 {strides = array<i32>} : memref<8x128xf32, #tpu.memory_space<vmem>>, vector<8x128xf32>,
    return
  }
}

</mosaic_0001>

<llo_original>
// kernel: tpu_custom_call.1
$region0: #{tpu_custom_call.1}
  #allocation0 [shape = 'u32[]', space=smem, size = 0x4, offset = 0x4, fixed_abs, tag = 'smem constant byte address 0x4 - core index']
  #allocation1 [shape = 'u32[144,128]{1,0:T(1,128)}', space=vmem, size = 0x12000, scoped, tag = 'internal scratch']
  %s0 = inlined_call_operand.hbm [shape: f32[8,8,128], index: 0, kind: input, shape index: {}]
  %s1 = inlined_call_operand.vmem [shape: f32[1,128], index: 1, kind: input, shape index: {}]
  %s2 = inlined_call_operand.vmem [shape: f32[8,2], index: 2, kind: input, shape index: {}]
  %s3 = inlined_call_operand.vmem [shape: f32[8,128], index: 3, kind: input, shape index: {}]
  %s4 = inlined_call_operand.vmem [shape: f32[8,128], index: 4, kind: input, shape index: {}]
  %s5 = inlined_call_operand.hbm [shape: f32[258,128], index: 5, kind: input, shape index: {}]
  %s6 = inlined_call_operand.vmem [shape: f32[8], index: 6, kind: input, shape index: {}]
  %s7 = inlined_call_operand.hbm [shape: f32[8,128], index: 7, kind: output, shape index: {}]
  %s8 = sld [smem:[#allocation0]]
  $region50: #{tpu_custom_call.1} parent=0
    _
  %s10 = ssub.s32 1, %s8
  %s11 = scalar_select 0, %s10, %s8
  $region1: #{tpu_custom_call.1} parent=0
    #allocation2 [shape = 'u8[32768]{0}', space=vmem, size = 0x8000, scoped, tag = 'input window, operand 0, single buffered']
    #allocation3 [shape = 's32[1]{0}', space=sflag, size = 0x4, scoped, tag = 'scoped memory for tpu_custom_call.1']
    #allocation4 [shape = 's32[1]{0}', space=sflag, size = 0x4, scoped, tag = 'scoped memory for tpu_custom_call.1']
    #allocation5 [shape = 's32[1]{0}', space=sflag, size = 0x4, scoped, tag = 'scoped memory for tpu_custom_call.1']
    #allocation6 [shape = 'u8[135168]{0}', space=vmem, size = 0x21000, scoped, tag = 'input window, operand 5, single buffered']
    #allocation7 [shape = 's32[1]{0}', space=sflag, size = 0x4, scoped, tag = 'scoped memory for tpu_custom_call.1']
    #allocation8 [shape = 'u8[512]{0}', space=smem, size = 0x200, scoped, tag = 'input window, operand 6, single buffered']
    #allocation9 [shape = 'u8[4096]{0}', space=vmem, size = 0x1000, scoped, tag = 'output window, operand 0, single buffered']
    %12 = vsyncpa [#allocation3], 0
    %13 = vsyncpa [#allocation7], 0
    %14 = vsyncpa [#allocation5], 0
    %15 = vsyncpa [#allocation4], 0
    // Predicated region
    $region2: #{tpu_custom_call.1} parent=1 // pred_check
      _
    $region3: #{tpu_custom_call.1} parent=1 // pred_check_branch
      %17 = sbr.rel (0) target = $region5
    $region4: #{tpu_custom_call.1} parent=1 // pred_region
      %s19 = ssub.s32 1024, 1024
      %20 = vsyncadd [#allocation3], %s19
      %s21 = sshll.u32 [#allocation2], 4
      %s22 = int_to_ptr.vmem [resolvable:$true] %s21
      %27 = dma.hbm_to_vmem [thread:$0]  %s0, 1024, %s22, [#allocation3], 128, 128, 8
    $region5: #{tpu_custom_call.1} parent=1 // pred_fallthru
      _
    // Predicated region
    $region6: #{tpu_custom_call.1} parent=1 // pred_check
      _
    $region7: #{tpu_custom_call.1} parent=1 // pred_check_branch
      %29 = sbr.rel (0) target = $region9
    $region8: #{tpu_custom_call.1} parent=1 // pred_region
      _
    $region9: #{tpu_custom_call.1} parent=1 // pred_fallthru
      _
    // Predicated region
    $region10: #{tpu_custom_call.1} parent=1 // pred_check
      _
    $region11: #{tpu_custom_call.1} parent=1 // pred_check_branch
      %31 = sbr.rel (0) target = $region13
    $region12: #{tpu_custom_call.1} parent=1 // pred_region
      _
    $region13: #{tpu_custom_call.1} parent=1 // pred_fallthru
      _
    // Predicated region
    $region14: #{tpu_custom_call.1} parent=1 // pred_check
      _
    $region15: #{tpu_custom_call.1} parent=1 // pred_check_branch
      %33 = sbr.rel (0) target = $region17
    $region16: #{tpu_custom_call.1} parent=1 // pred_region
      _
    $region17: #{tpu_custom_call.1} parent=1 // pred_fallthru
      _
    // Predicated region
    $region18: #{tpu_custom_call.1} parent=1 // pred_check
      _
    $region19: #{tpu_custom_call.1} parent=1 // pred_check_branch
      %35 = sbr.rel (0) target = $region21
    $region20: #{tpu_custom_call.1} parent=1 // pred_region
      _
    $region21: #{tpu_custom_call.1} parent=1 // pred_fallthru
      _
    // Predicated region
    $region22: #{tpu_custom_call.1} parent=1 // pred_check
      _
    $region23: #{tpu_custom_call.1} parent=1 // pred_check_branch
      %37 = sbr.rel (0) target = $region25
    $region24: #{tpu_custom_call.1} parent=1 // pred_region
      %s39 = ssub.s32 4224, 4224
      %40 = vsyncadd [#allocation7], %s39
      %s41 = sshll.u32 [#allocation6], 4
      %s42 = int_to_ptr.vmem [resolvable:$true] %s41
      %47 = dma.hbm_to_vmem [thread:$0]  %s5, 4224, %s42, [#allocation7], 128, 128, 8
    $region25: #{tpu_custom_call.1} parent=1 // pred_fallthru
      _
    // Predicated region
    $region26: #{tpu_custom_call.1} parent=1 // pred_check
      _
    $region27: #{tpu_custom_call.1} parent=1 // pred_check_branch
      %49 = sbr.rel (0) target = $region29
    $region28: #{tpu_custom_call.1} parent=1 // pred_region
      %s51 = ssub.s32 16, 16
      %52 = vsyncadd [#allocation5], %s51
      %s54 = sshll.u32 %s6, 4
      %s55 = int_to_ptr.vmem [resolvable:$true] %s54
      %57 = dma.vmem_to_smem %s55, 16, [#allocation8], [#allocation5]
    $region29: #{tpu_custom_call.1} parent=1 // pred_fallthru
      _
    // Predicated region
    $region30: #{tpu_custom_call.1} parent=1 // pred_check
      _
    $region31: #{tpu_custom_call.1} parent=1 // pred_check_branch
      %59 = sbr.rel (0) target = $region33
    $region32: #{tpu_custom_call.1} parent=1 // pred_region
      %60 = dma.done [#allocation3], 1024
    $region33: #{tpu_custom_call.1} parent=1 // pred_fallthru
      _
    // Predicated region
    $region34: #{tpu_custom_call.1} parent=1 // pred_check
      _
    $region35: #{tpu_custom_call.1} parent=1 // pred_check_branch
      %62 = sbr.rel (0) target = $region37
    $region36: #{tpu_custom_call.1} parent=1 // pred_region
      %63 = dma.done [#allocation7], 4224
    $region37: #{tpu_custom_call.1} parent=1 // pred_fallthru
      _
    // Predicated region
    $region38: #{tpu_custom_call.1} parent=1 // pred_check
      _
    $region39: #{tpu_custom_call.1} parent=1 // pred_check_branch
      %65 = sbr.rel (0) target = $region41
    $region40: #{tpu_custom_call.1} parent=1 // pred_region
      %66 = dma.done [#allocation5], 16
    $region41: #{tpu_custom_call.1} parent=1 // pred_fallthru
      _
    %67 = sfence
    %v68 = vld [vmem:[#allocation2] sm:$0xff]
    %s69 = sld [smem:[#allocation8]]
    %v70 = vstv %s69
    %v71 = vmul.f32 %v68, %v70
    %s72 = scalar_lea.vmem [#allocation2], 8
    %v73 = vld [vmem:[%s72] sm:$0xff]
    %s74 = sld [smem:[#allocation8 + $0x1]]
    %v75 = vstv %s74
    %v76 = vmul.f32 %v73, %v75
    %v77 = vadd.f32 %v71, %v76
    %s78 = scalar_lea.vmem [#allocation2], 16
    %v79 = vld [vmem:[%s78] sm:$0xff]
    %s80 = sld [smem:[#allocation8 + $0x2]]
    %v81 = vstv %s80
    %v82 = vmul.f32 %v79, %v81
    %v83 = vadd.f32 %v77, %v82
    %s84 = scalar_lea.vmem [#allocation2], 24
    %v85 = vld [vmem:[%s84] sm:$0xff]
    %s86 = sld [smem:[#allocation8 + $0x3]]
    %v87 = vstv %s86
    %v88 = vmul.f32 %v85, %v87
    %v89 = vadd.f32 %v83, %v88
    %s90 = scalar_lea.vmem [#allocation2], 32
    %v91 = vld [vmem:[%s90] sm:$0xff]
    %s92 = sld [smem:[#allocation8 + $0x4]]
    %v93 = vstv %s92
    %v94 = vmul.f32 %v91, %v93
    %v95 = vadd.f32 %v89, %v94
    %s96 = scalar_lea.vmem [#allocation2], 40
    %v97 = vld [vmem:[%s96] sm:$0xff]
    %s98 = sld [smem:[#allocation8 + $0x5]]
    %v99 = vstv %s98
    %v100 = vmul.f32 %v97, %v99
    %v101 = vadd.f32 %v95, %v100
    %s102 = scalar_lea.vmem [#allocation2], 48
    %v103 = vld [vmem:[%s102] sm:$0xff]
    %s104 = sld [smem:[#allocation8 + $0x6]]
    %v105 = vstv %s104
    %v106 = vmul.f32 %v103, %v105
    %v107 = vadd.f32 %v101, %v106
    %s108 = scalar_lea.vmem [#allocation2], 56
    %v109 = vld [vmem:[%s108] sm:$0xff]
    %s110 = sld [smem:[#allocation8 + $0x7]]
    %v111 = vstv %s110
    %v112 = vmul.f32 %v109, %v111
    %v113 = vadd.f32 %v107, %v112
    %v114 = vld [vmem:[%s1] sm:$0x1]
    %v116 = vlaneseq
    %v117 = vshrl.u32 %v116, 7
    %v118 = vsub.s32 0, %v117
    %v119 = vrot.slane %v114, %v118
    %v121 = vld [vmem:[#allocation6] sm:$0xff]
    %v122 = vld [vmem:[#allocation6 + $0x8] sm:$0xff]
    %v123 = vld [vmem:[#allocation6 + $0x10] sm:$0xff]
    %v124 = vld [vmem:[#allocation6 + $0x18] sm:$0xff]
    %v125 = vld [vmem:[#allocation6 + $0x20] sm:$0xff]
    %v126 = vld [vmem:[#allocation6 + $0x28] sm:$0xff]
    %v127 = vld [vmem:[#allocation6 + $0x30] sm:$0xff]
    %v128 = vld [vmem:[#allocation6 + $0x38] sm:$0xff]
    %v129 = vld [vmem:[#allocation6 + $0x40] sm:$0xff]
    %v130 = vld [vmem:[#allocation6 + $0x48] sm:$0xff]
    %v131 = vld [vmem:[#allocation6 + $0x50] sm:$0xff]
    %v132 = vld [vmem:[#allocation6 + $0x58] sm:$0xff]
    %v133 = vld [vmem:[#allocation6 + $0x60] sm:$0xff]
    %v134 = vld [vmem:[#allocation6 + $0x68] sm:$0xff]
    %v135 = vld [vmem:[#allocation6 + $0x70] sm:$0xff]
    %v136 = vld [vmem:[#allocation6 + $0x78] sm:$0xff]
    %137 = vmatprep.subr.mxu0 0.0
    %138 = vmatpush1.msra.mxu0 %v121
    %139 = vmatprep.subr.mxu0 0.0
    %140 = vmatpush1.msra.mxu0 %v122
    %141 = vmatprep.subr.mxu0 0.0
    %142 = vmatpush1.msra.mxu0 %v123
    %143 = vmatprep.subr.mxu0 0.0
    %144 = vmatpush1.msra.mxu0 %v124
    %145 = vmatprep.subr.mxu0 0.0
    %146 = vmatpush1.msra.mxu0 %v125
    %147 = vmatprep.subr.mxu0 0.0
    %148 = vmatpush1.msra.mxu0 %v126
    %149 = vmatprep.subr.mxu0 0.0
    %150 = vmatpush1.msra.mxu0 %v127
    %151 = vmatprep.subr.mxu0 0.0
    %152 = vmatpush1.msra.mxu0 %v128
    %153 = vmatprep.subr.mxu0 0.0
    %154 = vmatpush1.msra.mxu0 %v129
    %155 = vmatprep.subr.mxu0 0.0
    %156 = vmatpush1.msra.mxu0 %v130
    %157 = vmatprep.subr.mxu0 0.0
    %158 = vmatpush1.msra.mxu0 %v131
    %159 = vmatprep.subr.mxu0 0.0
    %160 = vmatpush1.msra.mxu0 %v132
    %161 = vmatprep.subr.mxu0 0.0
    %162 = vmatpush1.msra.mxu0 %v133
    %163 = vmatprep.subr.mxu0 0.0
    %164 = vmatpush1.msra.mxu0 %v134
    %165 = vmatprep.subr.mxu0 0.0
    %166 = vmatpush1.msra.mxu0 %v135
    %167 = vmatprep.subr.mxu0 0.0
    %168 = vmatpush1.msra.mxu0 %v136
    %169 = vmatprep.subr.mxu0 0.0
    %170 = vmatpush1.msra.mxu0 0.0
    %171 = vmatprep.subr.mxu0 0.0
    %172 = vmatpush1.msra.mxu0 0.0
    %173 = vmatprep.subr.mxu0 0.0
    %174 = vmatpush1.msra.mxu0 0.0
    %175 = vmatprep.subr.mxu0 0.0
    %176 = vmatpush1.msra.mxu0 0.0
    %177 = vmatprep.subr.mxu0 0.0
    %178 = vmatpush1.msra.mxu0 0.0
    %179 = vmatprep.subr.mxu0 0.0
    %180 = vmatpush1.msra.mxu0 0.0
    %181 = vmatprep.subr.mxu0 0.0
    %182 = vmatpush1.msra.mxu0 0.0
    %183 = vmatprep.subr.mxu0 0.0
    %184 = vmatpush1.msra.mxu0 0.0
    %185 = vmatprep.subr.mxu0 0.0
    %186 = vmatpush1.msra.mxu0 0.0
    %187 = vmatprep.subr.mxu0 0.0
    %188 = vmatpush1.msra.mxu0 0.0
    %189 = vmatprep.subr.mxu0 0.0
    %190 = vmatpush1.msra.mxu0 0.0
    %191 = vmatprep.subr.mxu0 0.0
    %192 = vmatpush1.msra.mxu0 0.0
    %193 = vmatprep.subr.mxu0 0.0
    %194 = vmatpush1.msra.mxu0 0.0
    %195 = vmatprep.subr.mxu0 0.0
    %196 = vmatpush1.msra.mxu0 0.0
    %197 = vmatprep.subr.mxu0 0.0
    %198 = vmatpush1.msra.mxu0 0.0
    %199 = vmatprep.subr.mxu0 0.0
    %200 = vmatpush1.msra.mxu0 0.0
    %201 = vmatprep.mubr.f32.mxu0 0.0
    %202 = vmatmul.mubr.f32.gmra.mrb[0].mxu0 %v119
    %v203 = vpop.f32.mrb[0].mxu0
    %v204 = vadd.f32 0.0, %v203
    %v205 = vpop.f32.mrb[0].mxu0
    %206 = vdwg.mxu0
    %v207 = vld [vmem:[#allocation6 + $0x80] sm:$0xff]
    %v208 = vld [vmem:[#allocation6 + $0x88] sm:$0xff]
    %v209 = vld [vmem:[#allocation6 + $0x90] sm:$0xff]
    %v210 = vld [vmem:[#allocation6 + $0x98] sm:$0xff]
    %v211 = vld [vmem:[#allocation6 + $0xa0] sm:$0xff]
    %v212 = vld [vmem:[#allocation6 + $0xa8] sm:$0xff]
    %v213 = vld [vmem:[#allocation6 + $0xb0] sm:$0xff]
    %v214 = vld [vmem:[#allocation6 + $0xb8] sm:$0xff]
    %v215 = vld [vmem:[#allocation6 + $0xc0] sm:$0xff]
    %v216 = vld [vmem:[#allocation6 + $0xc8] sm:$0xff]
    %v217 = vld [vmem:[#allocation6 + $0xd0] sm:$0xff]
    %v218 = vld [vmem:[#allocation6 + $0xd8] sm:$0xff]
    %v219 = vld [vmem:[#allocation6 + $0xe0] sm:$0xff]
    %v220 = vld [vmem:[#allocation6 + $0xe8] sm:$0xff]
    %v221 = vld [vmem:[#allocation6 + $0xf0] sm:$0xff]
    %v222 = vld [vmem:[#allocation6 + $0xf8] sm:$0xff]
    %223 = vmatprep.subr.mxu0 0.0
    %224 = vmatpush1.msra.mxu0 %v207
    %225 = vmatprep.subr.mxu0 0.0
    %226 = vmatpush1.msra.mxu0 %v208
    %227 = vmatprep.subr.mxu0 0.0
    %228 = vmatpush1.msra.mxu0 %v209
    %229 = vmatprep.subr.mxu0 0.0
    %230 = vmatpush1.msra.mxu0 %v210
    %231 = vmatprep.subr.mxu0 0.0
    %232 = vmatpush1.msra.mxu0 %v211
    %233 = vmatprep.subr.mxu0 0.0
    %234 = vmatpush1.msra.mxu0 %v212
    %235 = vmatprep.subr.mxu0 0.0
    %236 = vmatpush1.msra.mxu0 %v213
    %237 = vmatprep.subr.mxu0 0.0
    %238 = vmatpush1.msra.mxu0 %v214
    %239 = vmatprep.subr.mxu0 0.0
    %240 = vmatpush1.msra.mxu0 %v215
    %241 = vmatprep.subr.mxu0 0.0
    %242 = vmatpush1.msra.mxu0 %v216
    %243 = vmatprep.subr.mxu0 0.0
    %244 = vmatpush1.msra.mxu0 %v217
    %245 = vmatprep.subr.mxu0 0.0
    %246 = vmatpush1.msra.mxu0 %v218
    %247 = vmatprep.subr.mxu0 0.0
    %248 = vmatpush1.msra.mxu0 %v219
    %249 = vmatprep.subr.mxu0 0.0
    %250 = vmatpush1.msra.mxu0 %v220
    %251 = vmatprep.subr.mxu0 0.0
    %252 = vmatpush1.msra.mxu0 %v221
    %253 = vmatprep.subr.mxu0 0.0
    %254 = vmatpush1.msra.mxu0 %v222
    %255 = vmatprep.subr.mxu0 0.0
    %256 = vmatpush1.msra.mxu0 0.0
    %257 = vmatprep.subr.mxu0 0.0
    %258 = vmatpush1.msra.mxu0 0.0
    %259 = vmatprep.subr.mxu0 0.0
    %260 = vmatpush1.msra.mxu0 0.0
    %261 = vmatprep.subr.mxu0 0.0
    %262 = vmatpush1.msra.mxu0 0.0
    %263 = vmatprep.subr.mxu0 0.0
    %264 = vmatpush1.msra.mxu0 0.0
    %265 = vmatprep.subr.mxu0 0.0
    %266 = vmatpush1.msra.mxu0 0.0
    %267 = vmatprep.subr.mxu0 0.0
    %268 = vmatpush1.msra.mxu0 0.0
    %269 = vmatprep.subr.mxu0 0.0
    %270 = vmatpush1.msra.mxu0 0.0
    %271 = vmatprep.subr.mxu0 0.0
    %272 = vmatpush1.msra.mxu0 0.0
    %273 = vmatprep.subr.mxu0 0.0
    %274 = vmatpush1.msra.mxu0 0.0
    %275 = vmatprep.subr.mxu0 0.0
    %276 = vmatpush1.msra.mxu0 0.0
    %277 = vmatprep.subr.mxu0 0.0
    %278 = vmatpush1.msra.mxu0 0.0
    %279 = vmatprep.subr.mxu0 0.0
    %280 = vmatpush1.msra.mxu0 0.0
    %281 = vmatprep.subr.mxu0 0.0
    %282 = vmatpush1.msra.mxu0 0.0
    %283 = vmatprep.subr.mxu0 0.0
    %284 = vmatpush1.msra.mxu0 0.0
    %285 = vmatprep.subr.mxu0 0.0
    %286 = vmatpush1.msra.mxu0 0.0
    %287 = vmatprep.mubr.f32.mxu0 0.0
    %288 = vmatmul.mubr.f32.gmra.mrb[0].mxu0 %v113
    %v289 = vpop.f32.mrb[0].mxu0
    %v290 = vadd.f32 %v204, %v289
    %v291 = vpop.f32.mrb[0].mxu0
    %292 = vdwg.mxu0
    %v293 = vld [vmem:[%s3] sm:$0xff]
    %v294 = vadd.f32 %v290, %v293
    %v295 = vld [vmem:[%s2] sm:$0xff]
    %v296 = vld [vmem:[#allocation6 + $0x100] sm:$0x1]
    %298 = vset.pattern.permute.xlu0 0
    %299 = vperm.xlu0 %298, %v295
    %v300 = vpop.permute.xlu0 %299
    %v302 = vlaneseq
    %v303 = vshrl.u32 %v302, 7
    %v304 = vsub.s32 0, %v303
    %v305 = vrot.slane %v296, %v304
    %v306 = vmul.f32 %v300, %v305
    %v307 = vadd.f32 %v294, %v306
    %v308 = vld [vmem:[#allocation6 + $0x101] sm:$0x1]
    %309 = vset.pattern.permute.xlu0 1
    %310 = vperm.xlu0 %309, %v295
    %v311 = vpop.permute.xlu0 %310
    %v313 = vlaneseq
    %v314 = vshrl.u32 %v313, 7
    %v315 = vsub.s32 0, %v314
    %v316 = vrot.slane %v308, %v315
    %v317 = vmul.f32 %v311, %v316
    %v318 = vadd.f32 %v307, %v317
    %319 = vmax.xlane.f32.xlu0 %v318
    %v320 = vpop.xlane.xlu0 %319
    %v321 = vsub.f32 %v318, %v320
    %v322 = vmul.f32 %v321, 1.442695
    %v323 = vpow.pop %v322
    %324 = vadd.xlane.f32.xlu0 %v323
    %v325 = vpop.xlane.xlu0 %324
    %v326 = vrcp.pop %v325
    %v327 = vmul.f32 %v323, %v326
    %v328 = vld [vmem:[%s4] sm:$0xff]
    %vm329 = vcmp.ne.f32.partialorder %v328, 0.0
    %v330 = vsel %vm329, 0.0, %v327
    %331 = vadd.xlane.f32.xlu0 %v330
    %v332 = vpop.xlane.xlu0 %331
    %v333 = vmax.f32 %v332, 1e-12
    %v334 = vrcp.pop %v333
    %v335 = vmul.f32 %v330, %v334
    %336 = vst [vmem:[#allocation9] sm:$0xff] %v335
    // Predicated region
    $region42: #{tpu_custom_call.1} parent=1 // pred_check
      _
    $region43: #{tpu_custom_call.1} parent=1 // pred_check_branch
      %338 = sbr.rel (0) target = $region45
    $region44: #{tpu_custom_call.1} parent=1 // pred_region
      %s340 = ssub.s32 128, 128
      %341 = vsyncadd [#allocation4], %s340
      %s343 = sshll.u32 [#allocation9], 4
      %s344 = int_to_ptr.vmem [resolvable:$true] %s343
      %346 = dma.vmem_to_hbm [thread:$0]  %s344, 128, %s7, [#allocation4]
    $region45: #{tpu_custom_call.1} parent=1 // pred_fallthru
      _
    // Predicated region
    $region46: #{tpu_custom_call.1} parent=1 // pred_check
      _
    $region47: #{tpu_custom_call.1} parent=1 // pred_check_branch
      %348 = sbr.rel (0) target = $region49
    $region48: #{tpu_custom_call.1} parent=1 // pred_region
      %349 = dma.done [#allocation4], 128
    $region49: #{tpu_custom_call.1} parent=1 // pred_fallthru
      _
    %350 = vsyncpa [#allocation3], 1
    %351 = vsyncpa [#allocation7], 1
    %352 = vsyncpa [#allocation4], 1
    %353 = vsyncpa [#allocation5], 1

</llo_original>
